<compile_context>
chip_gen: v5e
topology: v5e:2x2
jax: 0.10.0
libtpu: 0.0.40
codegen_flags: <defaults>
</compile_context>

<pallas_src>
import jax
import jax.numpy as jnp
from jax.experimental import pallas as pl
from jax.experimental.pallas import tpu as pltpu


def _round_up(x, m):
    return ((x + m - 1) // m) * m


def _pick_chunk(T, max_chunk=8):
    """Largest divisor of T that is <= max_chunk (timesteps per grid step)."""
    for tb in range(min(T, max_chunk), 0, -1):
        if T % tb == 0:
            return tb
    return 1


# ---------------------------------------------------------------------------
# Pass 1 kernel: serial recurrence. One grid step == TB timesteps (unrolled).
# Per step:  h_t = zxh[t] + h_{t-1} @ W_hh   (bf16 MXU, f32 accumulate)
# ---------------------------------------------------------------------------
def rnn_recurrent_kernel(zxh_ref, h0_ref, whh_ref, hs_ref, hlast_ref):
    c = pl.program_id(0)

    @pl.when(c == 0)
    def _():
        hlast_ref[...] = h0_ref[...]          # initialize the resident carry

    whh = whh_ref[...]                        # (Hp, Hp) bf16, VMEM-resident
    h = hlast_ref[...]                        # (Bp, Hp) f32 carry (resident)

    # Fully unrolled chunk of TB timesteps (TB is a static Python int).
    for i in range(zxh_ref.shape[0]):
        h = zxh_ref[i] + jnp.dot(h.astype(jnp.bfloat16), whh,
                                 preferred_element_type=jnp.float32)
        hs_ref[i] = h                         # per-step hidden for pass 2

    hlast_ref[...] = h                        # one carry store per chunk


# ---------------------------------------------------------------------------
# Pass 2 kernel: fully parallel output head + log-softmax, batched over TB*Bp.
#   out1_t = zxo[t] + h_{t-1} @ W_io[I:]
#   out_t  = out1_t @ W_ou[:O] + h_t @ W_ou[O:] + b_ou     (padded lanes -1e30)
#   y_t    = log_softmax(out_t)
# ---------------------------------------------------------------------------
def rnn_output_kernel(zxo_ref, hprev_ref, hcur_ref,
                      wio_h_ref, wou_o_ref, wou_h_ref, bou_ref, out_ref):
    TB, Bp, Hp = hcur_ref.shape
    Op = out_ref.shape[-1]

    hprev = hprev_ref[...].reshape(TB * Bp, Hp).astype(jnp.bfloat16)
    hcur = hcur_ref[...].reshape(TB * Bp, Hp).astype(jnp.bfloat16)
    zxo = zxo_ref[...].reshape(TB * Bp, Op)

    out1 = zxo + jnp.dot(hprev, wio_h_ref[...],
                         preferred_element_type=jnp.float32)
    logits = (
        jnp.dot(out1.astype(jnp.bfloat16), wou_o_ref[...],
                preferred_element_type=jnp.float32)
        + jnp.dot(hcur, wou_h_ref[...], preferred_element_type=jnp.float32)
        + bou_ref[...]                       # f32; padded logit lanes = -1e30
    )

    # TODO(synk): nn.Dropout() is stochastic in training mode; implemented as
    # the inference-mode identity (masking would need pltpu.prng_*).

    # LogSoftmax along dim=1 in f32 (padded lanes contribute exactly 0).
    m = jnp.max(logits, axis=-1, keepdims=True)
    y = logits - m
    lse = jnp.log(jnp.sum(jnp.exp(y), axis=-1, keepdims=True))
    out_ref[...] = (y - lse).reshape(TB, Bp, Op)


# ---------------------------------------------------------------------------
# One-time parameter preprocessing (all slicing / padding / dtype casts here).
# ---------------------------------------------------------------------------
def preprocess_params(params, input_size, hidden_size, output_size):
    W_ih, b_ih, W_io, b_io, W_ou, b_ou = params
    I, H, O = input_size, hidden_size, output_size
    Hp, Op = _round_up(H, 128), _round_up(O, 128)

    def pad2(a, rows, cols):
        return jnp.pad(a, ((0, rows - a.shape[0]), (0, cols - a.shape[1])))

    wih_x, wih_h = W_ih[:I], W_ih[I:]        # (I,H), (H,H)
    wio_x, wio_h = W_io[:I], W_io[I:]        # (I,O), (H,O)
    wou_o, wou_h = W_ou[:O], W_ou[O:]        # (O,O), (H,O)

    return dict(
        # f32: used by the one-shot parallel XLA precompute (off serial path);
        # biases folded here so no bias broadcast runs inside the recurrence.
        wih_x=pad2(wih_x, I, Hp),
        b_ih=jnp.pad(b_ih, (0, Hp - H)),
        wio_x=pad2(wio_x, I, Op),
        b_io=jnp.pad(b_io, (0, Op - O)),
        # bf16: VMEM-resident MXU weights inside the Pallas kernels.
        whh=pad2(wih_h, Hp, Hp).astype(jnp.bfloat16),
        wio_h=pad2(wio_h, Hp, Op).astype(jnp.bfloat16),
        wou_o=pad2(wou_o, Op, Op).astype(jnp.bfloat16),
        wou_h=pad2(wou_h, Hp, Op).astype(jnp.bfloat16),
        # f32 logit bias; padded lanes get -1e30 so the log-softmax ignores them.
        bou=jnp.pad(b_ou, (0, Op - O), constant_values=-1e30).reshape(1, Op),
        dims=(I, H, O, Hp, Op),
    )


# ---------------------------------------------------------------------------
# Wrapper: xs (T, B, I), h0 (B, H) -> (log_probs (T, B, O), h_last (B, H))
# ---------------------------------------------------------------------------
def rnn_sequence(xs, h0, prep, *, chunk=8):
    I, H, O, Hp, Op = prep["dims"]
    T, B, _ = xs.shape
    Bp = _round_up(max(B, 1), 8)
    TB = _pick_chunk(T, chunk)
    n_chunks = T // TB

    xs_p = jnp.pad(xs, ((0, 0), (0, Bp - B), (0, 0)))
    h0_p = jnp.pad(h0, ((0, Bp - B), (0, Hp - H)))

    # --- Parallel precompute of the input projections (one big matmul each):
    zxh = jnp.einsum("tbi,ih->tbh", xs_p, prep["wih_x"]) + prep["b_ih"]  # (T,Bp,Hp)
    zxo = jnp.einsum("tbi,io->tbo", xs_p, prep["wio_x"]) + prep["b_io"]  # (T,Bp,Op)

    def resident(shape):  # weights / carried blocks: same block every grid step
        return pl.BlockSpec(shape, lambda c, _n=len(shape): (0,) * _n)

    # --- Pass 1: serial recurrence over time chunks.
    hs, h_last_p = pl.pallas_call(
        rnn_recurrent_kernel,
        grid_spec=pltpu.PrefetchScalarGridSpec(
            num_scalar_prefetch=0,
            grid=(n_chunks,),
            in_specs=[
                pl.BlockSpec((TB, Bp, Hp), lambda c: (c, 0, 0)),  # zxh chunk
                resident((Bp, Hp)),                               # h0
                resident((Hp, Hp)),                               # W_hh (bf16)
            ],
            out_specs=[
                pl.BlockSpec((TB, Bp, Hp), lambda c: (c, 0, 0)),  # h_t per step
                resident((Bp, Hp)),                               # carry / final h
            ],
        ),
        out_shape=(
            jax.ShapeDtypeStruct((T, Bp, Hp), jnp.float32),
            jax.ShapeDtypeStruct((Bp, Hp), jnp.float32),
        ),
        compiler_params=pltpu.CompilerParams(
            dimension_semantics=("arbitrary",),   # sequential carry over time
        ),
    )(zxh, h0_p, prep["whh"])

    # h_{t-1} for every step (cheap XLA concat, off the serial path).
    hprev = jnp.concatenate([h0_p[None], hs[:-1]], axis=0)

    # --- Pass 2: fully parallel output head + log-softmax.
    ys_p = pl.pallas_call(
        rnn_output_kernel,
        grid_spec=pltpu.PrefetchScalarGridSpec(
            num_scalar_prefetch=0,
            grid=(n_chunks,),
            in_specs=[
                pl.BlockSpec((TB, Bp, Op), lambda c: (c, 0, 0)),  # zxo
                pl.BlockSpec((TB, Bp, Hp), lambda c: (c, 0, 0)),  # h_{t-1}
                pl.BlockSpec((TB, Bp, Hp), lambda c: (c, 0, 0)),  # h_t
                resident((Hp, Op)),                               # W_io[I:] (bf16)
                resident((Op, Op)),                               # W_ou[:O] (bf16)
                resident((Hp, Op)),                               # W_ou[O:] (bf16)
                resident((1, Op)),                                # b_ou (-1e30 pad)
            ],
            out_specs=pl.BlockSpec((TB, Bp, Op), lambda c: (c, 0, 0)),
        ),
        out_shape=jax.ShapeDtypeStruct((T, Bp, Op), jnp.float32),
        compiler_params=pltpu.CompilerParams(
            dimension_semantics=("parallel",),
        ),
    )(zxo, hprev, hs, prep["wio_h"], prep["wou_o"], prep["wou_h"], prep["bou"])

    return ys_p[:, :B, :O], h_last_p[:B, :H]


def rnn_cell(x, h, prep):
    """Exactly the module's forward: x (B, I), h (B, H) -> (log_probs (B, O), h')."""
    out, h_new = rnn_sequence(x[None], h, prep)
    return out[0], h_new


# ---------------------------------------------------------------------------
# Parameter init and pure-JAX f32 reference (for correctness checking).
# ---------------------------------------------------------------------------
def init_params(key, input_size, hidden_size, output_size):
    """nn.Linear-style init: U(-1/sqrt(fan_in), 1/sqrt(fan_in)).
    Weights stored as (in_features, out_features), i.e. x @ W + b."""
    def linear(key, fan_in, fan_out):
        kw, kb = jax.random.split(key)
        bound = 1.0 / jnp.sqrt(fan_in)
        W = jax.random.uniform(kw, (fan_in, fan_out), jnp.float32, -bound, bound)
        b = jax.random.uniform(kb, (fan_out,), jnp.float32, -bound, bound)
        return W, b

    k1, k2, k3 = jax.random.split(key, 3)
    W_ih, b_ih = linear(k1, input_size + hidden_size, hidden_size)
    W_io, b_io = linear(k2, input_size + hidden_size, output_size)
    W_ou, b_ou = linear(k3, output_size + hidden_size, output_size)
    return (W_ih, b_ih, W_io, b_io, W_ou, b_ou)


def reference_step(x, h, params):
    W_ih, b_ih, W_io, b_io, W_ou, b_ou = params
    comb = jnp.concatenate([x, h], axis=1)
    hidden = comb @ W_ih + b_ih
    out = comb @ W_io + b_io
    out = jnp.concatenate([out, hidden], axis=1) @ W_ou + b_ou
    out = jax.nn.log_softmax(out, axis=1)
    return out, hidden


if __name__ == "__main__":
    B, I, H, O, T = 2, 16, 32, 24, 8
    key = jax.random.PRNGKey(0)
    kx, kp = jax.random.split(key)

    xs = jax.random.normal(kx, (T, B, I), jnp.float32)
    h0 = jnp.zeros((B, H), jnp.float32)          # == init_hidden() broadcast to batch
    params = init_params(kp, I, H, O)
    prep = preprocess_params(params, I, H, O)    # one-time weight fusion / padding

    # Fused sequence: parallel input projection + serial Pallas recurrence
    # (chunk=4 -> two grid steps, exercising the cross-chunk carry) + parallel
    # Pallas output head.
    ys, h_last = rnn_sequence(xs, h0, prep, chunk=4)
    jax.block_until_ready((ys, h_last))

    # Reference: apply the PyTorch forward step T times (pure f32).
    h_ref = h0
    outs_ref = []
    for t in range(T):
        o_r, h_ref = reference_step(xs[t], h_ref, params)
        outs_ref.append(o_r)
    ys_ref = jnp.stack(outs_ref)

    # bf16 MXU operands (f32 accumulate) -> compare with a loose tolerance.
    assert jnp.allclose(ys, ys_ref, atol=3e-2, rtol=1e-3), "sequence log-probs mismatch"
    assert jnp.allclose(h_last, h_ref, atol=3e-2, rtol=1e-3), "final hidden mismatch"

    # Single-step wrapper (same signature as the module's forward).
    out1, h1 = rnn_cell(xs[0], h0, prep)
    jax.block_until_ready((out1, h1))
    o1_ref, h1_ref = reference_step(xs[0], h0, params)
    assert jnp.allclose(out1, o1_ref, atol=3e-2, rtol=1e-3), "single-step output mismatch"
    assert jnp.allclose(h1, h1_ref, atol=3e-2, rtol=1e-3), "single-step hidden mismatch"

    print("KERNEL_OK")
</pallas_src>

<mosaic_0001>
module attributes {stable_mosaic.version = 11 : i64} {
  func.func @rnn_recurrent_kernel(%arg0: i32, %arg1: memref<4x8x128xf32, #tpu.memory_space<vmem>>, %arg2: memref<8x128xf32, #tpu.memory_space<vmem>>, %arg3: memref<128x128xbf16, #tpu.memory_space<vmem>>, %arg4: memref<4x8x128xf32, #tpu.memory_space<vmem>>, %arg5: memref<8x128xf32, #tpu.memory_space<vmem>>) attributes {dimension_semantics = [#tpu.dimension_semantics<arbitrary>], iteration_bounds = array<i64: 2>, scalar_prefetch = 0 : i64, scratch_operands = 0 : i64, tpu.core_type = #tpu.core_type<tc>, window_params = [{transform_indices = @transform_0, window_bounds = array<i64: 4, 8, 128>}, {pipeline_mode = #tpu.pipeline_mode<synchronous>, transform_indices = @transform_1, window_bounds = array<i64: 8, 128>}, {pipeline_mode = #tpu.pipeline_mode<synchronous>, transform_indices = @transform_2, window_bounds = array<i64: 128, 128>}, {transform_indices = @transform_3, window_bounds = array<i64: 4, 8, 128>}, {pipeline_mode = #tpu.pipeline_mode<synchronous>, transform_indices = @transform_4, window_bounds = array<i64: 8, 128>}]} {
    %c0_i32 = arith.constant 0 : i32
    %0 = arith.cmpi eq, %arg0, %c0_i32 : i32
    %1 = arith.extui %0 : i1 to i32
    %c0_i32_0 = arith.constant 0 : i32
    %2 = arith.cmpi ne, %1, %c0_i32_0 : i32
    scf.if %2 {
      %c0_30 = arith.constant 0 : index
      %c0_31 = arith.constant 0 : index
      %38 = vector.load %arg2[%c0_30, %c0_31] : memref<8x128xf32, #tpu.memory_space<vmem>>, vector<8x128xf32>
      %c0_32 = arith.constant 0 : index
      %c0_33 = arith.constant 0 : index
      %39 = vector.load %arg5[%c0_32, %c0_33] : memref<8x128xf32, #tpu.memory_space<vmem>>, vector<8x128xf32>
      tpu.vector_store %arg5[%c0_32, %c0_33], %38 {strides = array<i32>} : memref<8x128xf32, #tpu.memory_space<vmem>>, vector<8x128xf32>,
    } else {
    }
    %c0 = arith.constant 0 : index
    %c0_1 = arith.constant 0 : index
    %3 = vector.load %arg3[%c0, %c0_1] : memref<128x128xbf16, #tpu.memory_space<vmem>>, vector<128x128xbf16>
    %c0_2 = arith.constant 0 : index
    %c0_3 = arith.constant 0 : index
    %4 = vector.load %arg5[%c0_2, %c0_3] : memref<8x128xf32, #tpu.memory_space<vmem>>, vector<8x128xf32>
    %c0_4 = arith.constant 0 : index
    %c0_5 = arith.constant 0 : index
    %c0_6 = arith.constant 0 : index
    %5 = vector.load %arg1[%c0_4, %c0_5, %c0_6] : memref<4x8x128xf32, #tpu.memory_space<vmem>>, vector<1x8x128xf32>
    %6 = vector.shape_cast %5 : vector<1x8x128xf32> to vector<8x128xf32>
    %7 = arith.truncf %4 : vector<8x128xf32> to vector<8x128xbf16>
    %cst = arith.constant dense<0.000000e+00> : vector<8x128xf32>
    %8 = tpu.matmul %7, %3, %cst {dimension_numbers = #tpu.dot_dimension_numbers<[1], [0], [0], [1], [0, 0, 1, 1], [], []>} : vector<8x128xbf16>, vector<128x128xbf16>, vector<8x128xf32> -> vector<8x128xf32>
    %9 = arith.addf %6, %8 : vector<8x128xf32>
    %c0_7 = arith.constant 0 : index
    %c0_8 = arith.constant 0 : index
    %c0_9 = arith.constant 0 : index
    %10 = vector.load %arg4[%c0_7, %c0_8, %c0_9] : memref<4x8x128xf32, #tpu.memory_space<vmem>>, vector<1x8x128xf32>
    %11 = vector.shape_cast %10 : vector<1x8x128xf32> to vector<8x128xf32>
    %12 = vector.shape_cast %9 : vector<8x128xf32> to vector<1x8x128xf32>
    tpu.vector_store %arg4[%c0_7, %c0_8, %c0_9], %12 {strides = array<i32>} : memref<4x8x128xf32, #tpu.memory_space<vmem>>, vector<1x8x128xf32>,
    %c1 = arith.constant 1 : index
    %c0_10 = arith.constant 0 : index
    %c0_11 = arith.constant 0 : index
    %13 = vector.load %arg1[%c1, %c0_10, %c0_11] : memref<4x8x128xf32, #tpu.memory_space<vmem>>, vector<1x8x128xf32>
    %14 = vector.shape_cast %13 : vector<1x8x128xf32> to vector<8x128xf32>
    %15 = arith.truncf %9 : vector<8x128xf32> to vector<8x128xbf16>
    %cst_12 = arith.constant dense<0.000000e+00> : vector<8x128xf32>
    %16 = tpu.matmul %15, %3, %cst_12 {dimension_numbers = #tpu.dot_dimension_numbers<[1], [0], [0], [1], [0, 0, 1, 1], [], []>} : vector<8x128xbf16>, vector<128x128xbf16>, vector<8x128xf32> -> vector<8x128xf32>
    %17 = arith.addf %14, %16 : vector<8x128xf32>
    %c1_13 = arith.constant 1 : index
    %c0_14 = arith.constant 0 : index
    %c0_15 = arith.constant 0 : index
    %18 = vector.load %arg4[%c1_13, %c0_14, %c0_15] : memref<4x8x128xf32, #tpu.memory_space<vmem>>, vector<1x8x128xf32>
    %19 = vector.shape_cast %18 : vector<1x8x128xf32> to vector<8x128xf32>
    %20 = vector.shape_cast %17 : vector<8x128xf32> to vector<1x8x128xf32>
    tpu.vector_store %arg4[%c1_13, %c0_14, %c0_15], %20 {strides = array<i32>} : memref<4x8x128xf32, #tpu.memory_space<vmem>>, vector<1x8x128xf32>,
    %c2 = arith.constant 2 : index
    %c0_16 = arith.constant 0 : index
    %c0_17 = arith.constant 0 : index
    %21 = vector.load %arg1[%c2, %c0_16, %c0_17] : memref<4x8x128xf32, #tpu.memory_space<vmem>>, vector<1x8x128xf32>
    %22 = vector.shape_cast %21 : vector<1x8x128xf32> to vector<8x128xf32>
    %23 = arith.truncf %17 : vector<8x128xf32> to vector<8x128xbf16>
    %cst_18 = arith.constant dense<0.000000e+00> : vector<8x128xf32>
    %24 = tpu.matmul %23, %3, %cst_18 {dimension_numbers = #tpu.dot_dimension_numbers<[1], [0], [0], [1], [0, 0, 1, 1], [], []>} : vector<8x128xbf16>, vector<128x128xbf16>, vector<8x128xf32> -> vector<8x128xf32>
    %25 = arith.addf %22, %24 : vector<8x128xf32>
    %c2_19 = arith.constant 2 : index
    %c0_20 = arith.constant 0 : index
    %c0_21 = arith.constant 0 : index
    %26 = vector.load %arg4[%c2_19, %c0_20, %c0_21] : memref<4x8x128xf32, #tpu.memory_space<vmem>>, vector<1x8x128xf32>
    %27 = vector.shape_cast %26 : vector<1x8x128xf32> to vector<8x128xf32>
    %28 = vector.shape_cast %25 : vector<8x128xf32> to vector<1x8x128xf32>
    tpu.vector_store %arg4[%c2_19, %c0_20, %c0_21], %28 {strides = array<i32>} : memref<4x8x128xf32, #tpu.memory_space<vmem>>, vector<1x8x128xf32>,
    %c3 = arith.constant 3 : index
    %c0_22 = arith.constant 0 : index
    %c0_23 = arith.constant 0 : index
    %29 = vector.load %arg1[%c3, %c0_22, %c0_23] : memref<4x8x128xf32, #tpu.memory_space<vmem>>, vector<1x8x128xf32>
    %30 = vector.shape_cast %29 : vector<1x8x128xf32> to vector<8x128xf32>
    %31 = arith.truncf %25 : vector<8x128xf32> to vector<8x128xbf16>
    %cst_24 = arith.constant dense<0.000000e+00> : vector<8x128xf32>
    %32 = tpu.matmul %31, %3, %cst_24 {dimension_numbers = #tpu.dot_dimension_numbers<[1], [0], [0], [1], [0, 0, 1, 1], [], []>} : vector<8x128xbf16>, vector<128x128xbf16>, vector<8x128xf32> -> vector<8x128xf32>
    %33 = arith.addf %30, %32 : vector<8x128xf32>
    %c3_25 = arith.constant 3 : index
    %c0_26 = arith.constant 0 : index
    %c0_27 = arith.constant 0 : index
    %34 = vector.load %arg4[%c3_25, %c0_26, %c0_27] : memref<4x8x128xf32, #tpu.memory_space<vmem>>, vector<1x8x128xf32>
    %35 = vector.shape_cast %34 : vector<1x8x128xf32> to vector<8x128xf32>
    %36 = vector.shape_cast %33 : vector<8x128xf32> to vector<1x8x128xf32>
    tpu.vector_store %arg4[%c3_25, %c0_26, %c0_27], %36 {strides = array<i32>} : memref<4x8x128xf32, #tpu.memory_space<vmem>>, vector<1x8x128xf32>,
    %c0_28 = arith.constant 0 : index
    %c0_29 = arith.constant 0 : index
    %37 = vector.load %arg5[%c0_28, %c0_29] : memref<8x128xf32, #tpu.memory_space<vmem>>, vector<8x128xf32>
    tpu.vector_store %arg5[%c0_28, %c0_29], %33 {strides = array<i32>} : memref<8x128xf32, #tpu.memory_space<vmem>>, vector<8x128xf32>,
    return
  }
  func.func @transform_0(%arg0: i32) -> (i32, i32, i32) {
    %c0_i32 = arith.constant 0 : i32
    %c0_i32_0 = arith.constant 0 : i32
    %c0_i32_1 = arith.constant 0 : i32
    return %arg0, %c0_i32, %c0_i32_0 : i32, i32, i32
  }
  func.func @transform_1(%arg0: i32) -> (i32, i32) {
    %c0_i32 = arith.constant 0 : i32
    %c0_i32_0 = arith.constant 0 : i32
    %c0_i32_1 = arith.constant 0 : i32
    return %c0_i32, %c0_i32_0 : i32, i32
  }
  func.func @transform_2(%arg0: i32) -> (i32, i32) {
    %c0_i32 = arith.constant 0 : i32
    %c0_i32_0 = arith.constant 0 : i32
    %c0_i32_1 = arith.constant 0 : i32
    return %c0_i32, %c0_i32_0 : i32, i32
  }
  func.func @transform_3(%arg0: i32) -> (i32, i32, i32) {
    %c0_i32 = arith.constant 0 : i32
    %c0_i32_0 = arith.constant 0 : i32
    %c0_i32_1 = arith.constant 0 : i32
    return %arg0, %c0_i32, %c0_i32_0 : i32, i32, i32
  }
  func.func @transform_4(%arg0: i32) -> (i32, i32) {
    %c0_i32 = arith.constant 0 : i32
    %c0_i32_0 = arith.constant 0 : i32
    %c0_i32_1 = arith.constant 0 : i32
    return %c0_i32, %c0_i32_0 : i32, i32
  }
}

</mosaic_0001>

<llo_original>
// kernel: tpu_custom_call.1
$region0: #{tpu_custom_call.1}
  #allocation0 [shape = 'u32[]', space=smem, size = 0x4, offset = 0x4, fixed_abs, tag = 'smem constant byte address 0x4 - core index']
  #allocation1 [shape = 'u32[72,128]{1,0:T(1,128)}', space=vmem, size = 0x9000, scoped, tag = 'internal scratch']
  %s0 = inlined_call_operand.hbm [shape: f32[8,8,128], index: 0, kind: input, shape index: {}]
  %s1 = inlined_call_operand.hbm [shape: f32[8,128], index: 1, kind: input, shape index: {}]
  %s2 = inlined_call_operand.hbm [shape: bf16[128,128], index: 2, kind: input, shape index: {}]
  %s3 = inlined_call_operand.hbm [shape: f32[8,8,128], index: 3, kind: output, shape index: {0}]
  %s4 = inlined_call_operand.hbm [shape: f32[8,128], index: 4, kind: output, shape index: {1}]
  %5 = xla_tuple %s3, %s4
  %s6 = sld [smem:[#allocation0]]
  $region69: #{tpu_custom_call.1} parent=0
    _
  %s8 = ssub.s32 1, %s6
  %s9 = scalar_select 0, %s8, %s6
  $region1: #{tpu_custom_call.1} parent=0
    #allocation2 [shape = 'u8[32768]{0}', space=vmem, size = 0x8000, scoped, tag = 'input window, operand 0']
    #allocation3 [shape = 's32[2]{0}', space=sflag, size = 0x8, scoped, tag = 'scoped memory for tpu_custom_call.1']
    #allocation4 [shape = 's32[2]{0}', space=sflag, size = 0x8, scoped, tag = 'scoped memory for tpu_custom_call.1']
    #allocation5 [shape = 'u8[4096]{0}', space=vmem, size = 0x1000, scoped, tag = 'input window, operand 1, single buffered']
    #allocation6 [shape = 's32[1]{0}', space=sflag, size = 0x4, scoped, tag = 'scoped memory for tpu_custom_call.1']
    #allocation7 [shape = 'u8[32768]{0}', space=vmem, size = 0x8000, scoped, tag = 'input window, operand 2, single buffered']
    #allocation8 [shape = 'u8[32768]{0}', space=vmem, size = 0x8000, scoped, tag = 'output window, operand 0']
    #allocation9 [shape = 'u8[4096]{0}', space=vmem, size = 0x1000, scoped, tag = 'output window, operand 1, single buffered']
    #allocation10 [shape = 's32[1]{0}', space=sflag, size = 0x4, scoped, tag = 'scoped memory for tpu_custom_call.1']
    %10 = vsyncpa [#allocation3], 0
    %s11 = scalar_lea.sflag [#allocation3], 1
    %12 = vsyncpa %s11, 0
    %13 = vsyncpa [#allocation6], 0
    %14 = vsyncpa [#allocation4], 0
    %s15 = scalar_lea.sflag [#allocation4], 1
    %16 = vsyncpa %s15, 0
    %17 = vsyncpa [#allocation10], 0
    loop: start=0, step=1, limit=4
    $region2: #{tpu_custom_call.1} parent=1 // loop_pre_header
      _
    $region3: #{tpu_custom_call.1} parent=1 // loop_header
      %s19 = sphi 0, %s23
      %p20 = scmp.ge.s32.totalorder %s19, 4
      %s29 = sphi 0, %s31
      %s32 = sphi 0, %s29
      %s33 = sphi 0, %s32
      %s49 = sphi 0, %s33
      %s53 = sphi 0, %s53
      %s55 = sphi 0, %s53
      %s56 = sphi 0, %s55
      %s70 = sphi 0, %s56
      %s74 = sphi 0, %s74
      %s76 = sphi 0, %s74
      %s77 = sphi 0, %s76
      %s91 = sphi 0, %s77
      %s97 = sphi 0, %s99
      %s100 = sphi 0, %s97
      %s101 = sphi 0, %s100
      %s117 = sphi 0, %s101
      %s121 = sphi 0, %s121
      %s123 = sphi 0, %s121
      %s124 = sphi 0, %s123
      %s138 = sphi 0, %s124
    $region4: #{tpu_custom_call.1} parent=1 // loop_header_branch
      %22 = sbr.rel (%p20) target = $region8
    $region5: #{tpu_custom_call.1} parent=1 // loop_body
      %s24 = ssub.s32 %s19, 1
      %s25 = ssub.s32 %s19, 2
      %s26 = sadd.s32 %s19, 1
      %s27 = ssub.s32 %s19, %s26
      %p28 = scmp.eq.s32.totalorder %s27, 0
      %s30 = sadd.s32 %s29, 1
      %s31 = scalar_select %p28, %s29, %s30
      %p34 = pneg %p28
      %p35 = scmp.eq.s32.totalorder %s19, 1
      %p36 = por %p34, %p35
      %p37 = scmp.ne.s32.totalorder %s29, %s32
      %p38 = scmp.eq.s32.totalorder %s19, 0
      %p39 = por %p37, %p38
      %p40 = scmp.ne.s32.totalorder %s29, %s32
      %p41 = scmp.eq.s32.totalorder %s24, 1
      %p42 = por %p40, %p41
      %p43 = scmp.ne.s32.totalorder %s32, %s33
      %p44 = scmp.eq.s32.totalorder %s24, 0
      %p45 = por %p43, %p44
      %p46 = scmp.ne.s32.totalorder %s32, %s33
      %p47 = scmp.eq.s32.totalorder %s25, 1
      %p48 = por %p46, %p47
      %p50 = scmp.ne.s32.totalorder %s33, %s49
      %p51 = scmp.eq.s32.totalorder %s25, 0
      %p52 = por %p50, %p51
      %s54 = sadd.s32 %s53, 1
      %p57 = scmp.eq.s32.totalorder %s19, 1
      %p58 = scmp.ne.s32.totalorder %s53, %s55
      %p59 = scmp.eq.s32.totalorder %s19, 0
      %p60 = por %p58, %p59
      %p61 = scmp.ne.s32.totalorder %s53, %s55
      %p62 = scmp.eq.s32.totalorder %s24, 1
      %p63 = por %p61, %p62
      %p64 = scmp.ne.s32.totalorder %s55, %s56
      %p65 = scmp.eq.s32.totalorder %s24, 0
      %p66 = por %p64, %p65
      %p67 = scmp.ne.s32.totalorder %s55, %s56
      %p68 = scmp.eq.s32.totalorder %s25, 1
      %p69 = por %p67, %p68
      %p71 = scmp.ne.s32.totalorder %s56, %s70
      %p72 = scmp.eq.s32.totalorder %s25, 0
      %p73 = por %p71, %p72
      %s75 = sadd.s32 %s74, 1
      %p78 = scmp.eq.s32.totalorder %s19, 1
      %p79 = scmp.ne.s32.totalorder %s74, %s76
      %p80 = scmp.eq.s32.totalorder %s19, 0
      %p81 = por %p79, %p80
      %p82 = scmp.ne.s32.totalorder %s74, %s76
      %p83 = scmp.eq.s32.totalorder %s24, 1
      %p84 = por %p82, %p83
      %p85 = scmp.ne.s32.totalorder %s76, %s77
      %p86 = scmp.eq.s32.totalorder %s24, 0
      %p87 = por %p85, %p86
      %p88 = scmp.ne.s32.totalorder %s76, %s77
      %p89 = scmp.eq.s32.totalorder %s25, 1
      %p90 = por %p88, %p89
      %p92 = scmp.ne.s32.totalorder %s77, %s91
      %p93 = scmp.eq.s32.totalorder %s25, 0
      %p94 = por %p92, %p93
      %s95 = ssub.s32 %s19, %s26
      %p96 = scmp.eq.s32.totalorder %s95, 0
      %s98 = sadd.s32 %s97, 1
      %s99 = scalar_select %p96, %s97, %s98
      %p102 = pneg %p96
      %p103 = scmp.eq.s32.totalorder %s19, 1
      %p104 = por %p102, %p103
      %p105 = scmp.ne.s32.totalorder %s97, %s100
      %p106 = scmp.eq.s32.totalorder %s19, 0
      %p107 = por %p105, %p106
      %p108 = scmp.ne.s32.totalorder %s97, %s100
      %p109 = scmp.eq.s32.totalorder %s24, 1
      %p110 = por %p108, %p109
      %p111 = scmp.ne.s32.totalorder %s100, %s101
      %p112 = scmp.eq.s32.totalorder %s24, 0
      %p113 = por %p111, %p112
      %p114 = scmp.ne.s32.totalorder %s100, %s101
      %p115 = scmp.eq.s32.totalorder %s25, 1
      %p116 = por %p114, %p115
      %p118 = scmp.ne.s32.totalorder %s101, %s117
      %p119 = scmp.eq.s32.totalorder %s25, 0
      %p120 = por %p118, %p119
      %s122 = sadd.s32 %s121, 1
      %p125 = scmp.eq.s32.totalorder %s19, 1
      %p126 = scmp.ne.s32.totalorder %s121, %s123
      %p127 = scmp.eq.s32.totalorder %s19, 0
      %p128 = por %p126, %p127
      %p129 = scmp.ne.s32.totalorder %s121, %s123
      %p130 = scmp.eq.s32.totalorder %s24, 1
      %p131 = por %p129, %p130
      %p132 = scmp.ne.s32.totalorder %s123, %s124
      %p133 = scmp.eq.s32.totalorder %s24, 0
      %p134 = por %p132, %p133
      %p135 = scmp.ne.s32.totalorder %s123, %s124
      %p136 = scmp.eq.s32.totalorder %s25, 1
      %p137 = por %p135, %p136
      %p139 = scmp.ne.s32.totalorder %s124, %s138
      %p140 = scmp.eq.s32.totalorder %s25, 0
      %p141 = por %p139, %p140
      %p142 = scmp.le.s32.totalorder 1, %s19
      %p143 = scmp.lt.s32.totalorder %s19, 3
      %p144 = pnand %p142, %p143
      %p145 = pneg %p144
      // Predicated region
      $region9: #{tpu_custom_call.1} parent=5 // pred_check
        _
      $region10: #{tpu_custom_call.1} parent=5 // pred_check_branch
        %147 = sbr.rel (%p144) target = $region12
      $region11: #{tpu_custom_call.1} parent=5 // pred_region
        %s148 = ssub.s32 %s19, 1
        // Predicated region
        $region13: #{tpu_custom_call.1} parent=11 // pred_check
          %p149 = pneg %p66
        $region14: #{tpu_custom_call.1} parent=11 // pred_check_branch
          %151 = sbr.rel (%p149) target = $region16
        $region15: #{tpu_custom_call.1} parent=11 // pred_region
          %153 = vsyncadd [#allocation6], 0
          %s155 = sshll.u32 %s1, 4
          %s156 = int_to_ptr.hbm [resolvable:$true] %s155
          %s157 = sshll.u32 [#allocation5], 4
          %s158 = int_to_ptr.vmem [resolvable:$true] %s157
          %160 = dma.hbm_to_vmem [thread:$0]  %s156, 128, %s158, [#allocation6]
        $region16: #{tpu_custom_call.1} parent=11 // pred_fallthru
          _
        // Predicated region
        $region17: #{tpu_custom_call.1} parent=11 // pred_check
          %p161 = pneg %p87
        $region18: #{tpu_custom_call.1} parent=11 // pred_check_branch
          %163 = sbr.rel (%p161) target = $region20
        $region19: #{tpu_custom_call.1} parent=11 // pred_region
          %165 = vsyncadd [#allocation6], 0
          %s166 = sshll.u32 %s2, 4
          %s167 = int_to_ptr.hbm [resolvable:$true] %s166
          %s168 = sshll.u32 [#allocation7], 4
          %s169 = int_to_ptr.vmem [resolvable:$true] %s168
          %174 = dma.hbm_to_vmem [thread:$0]  %s167, 1024, %s169, [#allocation6], 64, 64, 4
        $region20: #{tpu_custom_call.1} parent=11 // pred_fallthru
          _
      $region12: #{tpu_custom_call.1} parent=5 // pred_fallthru
        _
      %p175 = scmp.lt.s32.totalorder %s19, 2
      // Predicated region
      $region21: #{tpu_custom_call.1} parent=5 // pred_check
        %p176 = pneg %p175
      $region22: #{tpu_custom_call.1} parent=5 // pred_check_branch
        %178 = sbr.rel (%p176) target = $region24
      $region23: #{tpu_custom_call.1} parent=5 // pred_region
        // Predicated region
        $region25: #{tpu_custom_call.1} parent=23 // pred_check
          %p179 = pneg %p39
        $region26: #{tpu_custom_call.1} parent=23 // pred_check_branch
          %181 = sbr.rel (%p179) target = $region28
        $region27: #{tpu_custom_call.1} parent=23 // pred_region
          %s182 = sand.u32 %s29, 1
          %s183 = scalar_lea.sflag [#allocation3], %s182
          %s184 = sand.u32 %s29, 1
          %s185 = smul.addr %s184, 32
          %s186 = scalar_lea.vmem [#allocation2], %s185
          %s187 = smul.u32 4, %s19
          %189 = vsyncadd %s183, 0
          %s190 = smul.addr %s187, 8
          %s191 = scalar_lea.hbm %s0, %s190
          %s192 = sshll.u32 %s191, 4
          %s193 = int_to_ptr.hbm [resolvable:$true] %s192
          %s194 = sshll.u32 %s186, 4
          %s195 = int_to_ptr.vmem [resolvable:$true] %s194
          %200 = dma.hbm_to_vmem [thread:$0]  %s193, 512, %s195, %s183, 128, 128, 8
        $region28: #{tpu_custom_call.1} parent=23 // pred_fallthru
          _
      $region24: #{tpu_custom_call.1} parent=5 // pred_fallthru
        _
      %p201 = scmp.le.s32.totalorder 1, %s19
      %p202 = scmp.lt.s32.totalorder %s19, 3
      %p203 = pnand %p201, %p202
      %p204 = pneg %p203
      // Predicated region
      $region29: #{tpu_custom_call.1} parent=5 // pred_check
        _
      $region30: #{tpu_custom_call.1} parent=5 // pred_check_branch
        %206 = sbr.rel (%p203) target = $region32
      $region31: #{tpu_custom_call.1} parent=5 // pred_region
        %s207 = ssub.s32 %s19, 1
        %s208 = sand.u32 %s32, 1
        %s209 = scalar_lea.sflag [#allocation3], %s208
        %s210 = sand.u32 %s32, 1
        %s211 = smul.addr %s210, 32
        %s212 = scalar_lea.vmem [#allocation2], %s211
        // Predicated region
        $region33: #{tpu_custom_call.1} parent=31 // pred_check
          %p213 = pneg %p45
        $region34: #{tpu_custom_call.1} parent=31 // pred_check_branch
          %215 = sbr.rel (%p213) target = $region36
        $region35: #{tpu_custom_call.1} parent=31 // pred_region
          %217 = dma.done %s209, 512
        $region36: #{tpu_custom_call.1} parent=31 // pred_fallthru
          _
        // Predicated region
        $region37: #{tpu_custom_call.1} parent=31 // pred_check
          %p218 = pneg %p66
        $region38: #{tpu_custom_call.1} parent=31 // pred_check_branch
          %220 = sbr.rel (%p218) target = $region40
        $region39: #{tpu_custom_call.1} parent=31 // pred_region
          %222 = dma.done [#allocation6], 128
        $region40: #{tpu_custom_call.1} parent=31 // pred_fallthru
          _
        // Predicated region
        $region41: #{tpu_custom_call.1} parent=31 // pred_check
          %p223 = pneg %p87
        $region42: #{tpu_custom_call.1} parent=31 // pred_check_branch
          %225 = sbr.rel (%p223) target = $region44
        $region43: #{tpu_custom_call.1} parent=31 // pred_region
          %227 = dma.done [#allocation6], 1024
        $region44: #{tpu_custom_call.1} parent=31 // pred_fallthru
          _
        %s228 = sand.u32 %s32, 1
        %s229 = scalar_lea.sflag [#allocation3], %s228
        %s230 = sand.u32 %s32, 1
        %s231 = smul.addr %s230, 32
        %s232 = scalar_lea.vmem [#allocation2], %s231
        %p233 = pneg %p45
        %p234 = pneg %p42
        %p235 = pneg %p66
        %p236 = pneg %p63
        %p237 = pneg %p87
        %p238 = pneg %p84
        %p239 = pneg %p113
        %p240 = pneg %p110
        %s241 = sand.u32 %s100, 1
        %s242 = scalar_lea.sflag [#allocation4], %s241
        %s243 = sand.u32 %s100, 1
        %s244 = smul.addr %s243, 32
        %s245 = scalar_lea.vmem [#allocation8], %s244
        %p246 = pneg %p134
        %p247 = pneg %p131
        %s248 = smul.u32 4, %s24
        %s249 = smul.u32 4, %s24
        %p250 = scmp.eq.s32.totalorder %s24, 0
        // Predicated region
        $region45: #{tpu_custom_call.1} parent=31 // pred_check
          %p251 = pneg %p250
        $region46: #{tpu_custom_call.1} parent=31 // pred_check_branch
          %253 = sbr.rel (%p251) target = $region48
        $region47: #{tpu_custom_call.1} parent=31 // pred_region
          %v254 = vld [vmem:[#allocation5] sm:$0xff]
          %255 = vst [vmem:[#allocation9] sm:$0xff] %v254
        $region48: #{tpu_custom_call.1} parent=31 // pred_fallthru
          _
        %v256 = vld [vmem:[#allocation7] sm:$0xf]
        %v257 = vld [vmem:[#allocation7 + $0x4] sm:$0xf]
        %v258 = vld [vmem:[#allocation7 + $0x8] sm:$0xf]
        %v259 = vld [vmem:[#allocation7 + $0xc] sm:$0xf]
        %v260 = vld [vmem:[#allocation7 + $0x10] sm:$0xf]
        %v261 = vld [vmem:[#allocation7 + $0x14] sm:$0xf]
        %v262 = vld [vmem:[#allocation7 + $0x18] sm:$0xf]
        %v263 = vld [vmem:[#allocation7 + $0x1c] sm:$0xf]
        %v264 = vld [vmem:[#allocation7 + $0x20] sm:$0xf]
        %v265 = vld [vmem:[#allocation7 + $0x24] sm:$0xf]
        %v266 = vld [vmem:[#allocation7 + $0x28] sm:$0xf]
        %v267 = vld [vmem:[#allocation7 + $0x2c] sm:$0xf]
        %v268 = vld [vmem:[#allocation7 + $0x30] sm:$0xf]
        %v269 = vld [vmem:[#allocation7 + $0x34] sm:$0xf]
        %v270 = vld [vmem:[#allocation7 + $0x38] sm:$0xf]
        %v271 = vld [vmem:[#allocation7 + $0x3c] sm:$0xf]
        %v272 = vld [vmem:[#allocation9] sm:$0xff]
        %v273 = vld [vmem:[%s212] sm:$0xff]
        %v274 = vpack.c.bf16 %v272, %v272
        %v291 = vunpack.c.l.b16 %v256
        %v292 = vunpack.c.l.b16 %v257
        %v293 = vunpack.c.l.b16 %v258
        %v294 = vunpack.c.l.b16 %v259
        %v295 = vunpack.c.l.b16 %v260
        %v296 = vunpack.c.l.b16 %v261
        %v297 = vunpack.c.l.b16 %v262
        %v298 = vunpack.c.l.b16 %v263
        %v299 = vunpack.c.l.b16 %v264
        %v300 = vunpack.c.l.b16 %v265
        %v301 = vunpack.c.l.b16 %v266
        %v302 = vunpack.c.l.b16 %v267
        %v303 = vunpack.c.l.b16 %v268
        %v304 = vunpack.c.l.b16 %v269
        %v305 = vunpack.c.l.b16 %v270
        %v306 = vunpack.c.l.b16 %v271
        %v307 = vpack.c.b16 %v292, %v291
        %v308 = vpack.c.b16 %v294, %v293
        %v309 = vpack.c.b16 %v296, %v295
        %v310 = vpack.c.b16 %v298, %v297
        %v311 = vpack.c.b16 %v300, %v299
        %v312 = vpack.c.b16 %v302, %v301
        %v313 = vpack.c.b16 %v304, %v303
        %v314 = vpack.c.b16 %v306, %v305
        %323 = vmatpush.bf16.msra.mxu0 %v314
        %324 = vmatpush.bf16.msra.mxu0 %v313
        %325 = vmatpush.bf16.msra.mxu0 %v312
        %326 = vmatpush.bf16.msra.mxu0 %v311
        %327 = vmatpush.bf16.msra.mxu0 %v310
        %328 = vmatpush.bf16.msra.mxu0 %v309
        %329 = vmatpush.bf16.msra.mxu0 %v308
        %330 = vmatpush.bf16.msra.mxu0 %v307
        %331 = vmatmul.bf16.gmra.mxu0 %v274
        %v332 = vpop.f32.mrf.mxu0
        %v333 = vadd.f32 0.0, %v332
        %v334 = vpop.f32.mrf.mxu0
        %335 = vdwg.mxu0
        %v336 = vadd.f32 %v273, %v333
        %337 = vst [vmem:[%s245] sm:$0xff] %v336
        %s338 = scalar_lea.vmem %s212, 8 [#allocation2]
        %v339 = vld [vmem:[%s338] sm:$0xff]
        %v340 = vpack.c.bf16 %v336, %v336
        %341 = vmatpush.bf16.msra.mxu0 %v314
        %342 = vmatpush.bf16.msra.mxu0 %v313
        %343 = vmatpush.bf16.msra.mxu0 %v312
        %344 = vmatpush.bf16.msra.mxu0 %v311
        %345 = vmatpush.bf16.msra.mxu0 %v310
        %346 = vmatpush.bf16.msra.mxu0 %v309
        %347 = vmatpush.bf16.msra.mxu0 %v308
        %348 = vmatpush.bf16.msra.mxu0 %v307
        %349 = vmatmul.bf16.gmra.mxu0 %v340
        %v350 = vpop.f32.mrf.mxu0
        %v351 = vadd.f32 0.0, %v350
        %v352 = vpop.f32.mrf.mxu0
        %353 = vdwg.mxu0
        %v354 = vadd.f32 %v339, %v351
        %s355 = scalar_lea.vmem %s245, 8 [#allocation8]
        %356 = vst [vmem:[%s355] sm:$0xff] %v354
        %s357 = scalar_lea.vmem %s212, 16 [#allocation2]
        %v358 = vld [vmem:[%s357] sm:$0xff]
        %v359 = vpack.c.bf16 %v354, %v354
        %360 = vmatpush.bf16.msra.mxu0 %v314
        %361 = vmatpush.bf16.msra.mxu0 %v313
        %362 = vmatpush.bf16.msra.mxu0 %v312
        %363 = vmatpush.bf16.msra.mxu0 %v311
        %364 = vmatpush.bf16.msra.mxu0 %v310
        %365 = vmatpush.bf16.msra.mxu0 %v309
        %366 = vmatpush.bf16.msra.mxu0 %v308
        %367 = vmatpush.bf16.msra.mxu0 %v307
        %368 = vmatmul.bf16.gmra.mxu0 %v359
        %v369 = vpop.f32.mrf.mxu0
        %v370 = vadd.f32 0.0, %v369
        %v371 = vpop.f32.mrf.mxu0
        %372 = vdwg.mxu0
        %v373 = vadd.f32 %v358, %v370
        %s374 = scalar_lea.vmem %s245, 16 [#allocation8]
        %375 = vst [vmem:[%s374] sm:$0xff] %v373
        %s376 = scalar_lea.vmem %s212, 24 [#allocation2]
        %v377 = vld [vmem:[%s376] sm:$0xff]
        %v378 = vpack.c.bf16 %v373, %v373
        %379 = vmatpush.bf16.msra.mxu0 %v314
        %380 = vmatpush.bf16.msra.mxu0 %v313
        %381 = vmatpush.bf16.msra.mxu0 %v312
        %382 = vmatpush.bf16.msra.mxu0 %v311
        %383 = vmatpush.bf16.msra.mxu0 %v310
        %384 = vmatpush.bf16.msra.mxu0 %v309
        %385 = vmatpush.bf16.msra.mxu0 %v308
        %386 = vmatpush.bf16.msra.mxu0 %v307
        %387 = vmatmul.bf16.gmra.mxu0 %v378
        %v388 = vpop.f32.mrf.mxu0
        %v389 = vadd.f32 0.0, %v388
        %v390 = vpop.f32.mrf.mxu0
        %391 = vdwg.mxu0
        %v392 = vadd.f32 %v377, %v389
        %s393 = scalar_lea.vmem %s245, 24 [#allocation8]
        %394 = vst [vmem:[%s393] sm:$0xff] %v392
        %395 = vst [vmem:[#allocation9] sm:$0xff] %v392
        %s396 = sand.u32 %s100, 1
        %s397 = scalar_lea.sflag [#allocation4], %s396
        %s398 = sand.u32 %s100, 1
        %s399 = smul.addr %s398, 32
        %s400 = scalar_lea.vmem [#allocation8], %s399
        // Predicated region
        $region49: #{tpu_custom_call.1} parent=31 // pred_check
          %p401 = pneg %p110
        $region50: #{tpu_custom_call.1} parent=31 // pred_check_branch
          %403 = sbr.rel (%p401) target = $region52
        $region51: #{tpu_custom_call.1} parent=31 // pred_region
          %s404 = smul.u32 4, %s24
          %406 = vsyncadd %s397, 0
          %s407 = smul.addr %s404, 8
          %s408 = scalar_lea.hbm %s3, %s407
          %s409 = sshll.u32 %s400, 4
          %s410 = int_to_ptr.vmem [resolvable:$true] %s409
          %s411 = sshll.u32 %s408, 4
          %s412 = int_to_ptr.hbm [resolvable:$true] %s411
          %417 = dma.vmem_to_hbm [thread:$0]  %s410, 512, %s412, %s397, 128, 128, 8
        $region52: #{tpu_custom_call.1} parent=31 // pred_fallthru
          _
        // Predicated region
        $region53: #{tpu_custom_call.1} parent=31 // pred_check
          %p418 = pneg %p131
        $region54: #{tpu_custom_call.1} parent=31 // pred_check_branch
          %420 = sbr.rel (%p418) target = $region56
        $region55: #{tpu_custom_call.1} parent=31 // pred_region
          %422 = vsyncadd [#allocation10], 0
          %s424 = sshll.u32 [#allocation9], 4
          %s425 = int_to_ptr.vmem [resolvable:$true] %s424
          %s426 = sshll.u32 %s4, 4
          %s427 = int_to_ptr.hbm [resolvable:$true] %s426
          %429 = dma.vmem_to_hbm [thread:$0]  %s425, 128, %s427, [#allocation10]
        $region56: #{tpu_custom_call.1} parent=31 // pred_fallthru
          _
        // Predicated region
        $region57: #{tpu_custom_call.1} parent=31 // pred_check
          %p430 = pneg %p131
        $region58: #{tpu_custom_call.1} parent=31 // pred_check_branch
          %432 = sbr.rel (%p430) target = $region60
        $region59: #{tpu_custom_call.1} parent=31 // pred_region
          %434 = dma.done [#allocation10], 128
        $region60: #{tpu_custom_call.1} parent=31 // pred_fallthru
          _
      $region32: #{tpu_custom_call.1} parent=5 // pred_fallthru
        _
      %p435 = scmp.le.s32.totalorder 2, %s19
      // Predicated region
      $region61: #{tpu_custom_call.1} parent=5 // pred_check
        %p436 = pneg %p435
      $region62: #{tpu_custom_call.1} parent=5 // pred_check_branch
        %438 = sbr.rel (%p436) target = $region64
      $region63: #{tpu_custom_call.1} parent=5 // pred_region
        %s439 = ssub.s32 %s19, 2
        // Predicated region
        $region65: #{tpu_custom_call.1} parent=63 // pred_check
          %p440 = pneg %p116
        $region66: #{tpu_custom_call.1} parent=63 // pred_check_branch
          %442 = sbr.rel (%p440) target = $region68
        $region67: #{tpu_custom_call.1} parent=63 // pred_region
          %s443 = sand.u32 %s101, 1
          %s444 = scalar_lea.sflag [#allocation4], %s443
          %s445 = sand.u32 %s101, 1
          %s446 = smul.addr %s445, 32
          %s447 = scalar_lea.vmem [#allocation8], %s446
          %449 = dma.done %s444, 512
        $region68: #{tpu_custom_call.1} parent=63 // pred_fallthru
          _
      $region64: #{tpu_custom_call.1} parent=5 // pred_fallthru
        _
    $region6: #{tpu_custom_call.1} parent=1 // loop_footer
      %s23 = sadd.s32 1, %s19
    $region7: #{tpu_custom_call.1} parent=1 // loop_footer_branch
      %18 = sbr.rel target = $region3
    $region8: #{tpu_custom_call.1} parent=1 // loop_exit
      _
    %450 = vsyncpa [#allocation3], 1
    %s451 = scalar_lea.sflag [#allocation3], 1
    %452 = vsyncpa %s451, 1
    %453 = vsyncpa [#allocation6], 1
    %454 = vsyncpa [#allocation4], 1
    %s455 = scalar_lea.sflag [#allocation4], 1
    %456 = vsyncpa %s455, 1
    %457 = vsyncpa [#allocation10], 1

</llo_original>
